<compile_context>
chip_gen: v6e
topology: v6e:2x2x1
jax: 0.10.0
libtpu: 0.0.40
codegen_flags: <defaults>
</compile_context>

<pallas_src>
import functools

import jax
import jax.numpy as jnp
import numpy as np
from jax.experimental import pallas as pl
from jax.experimental.pallas import tpu as pltpu

_LANE = 128


def _round_up(x, m):
    return ((x + m - 1) // m) * m


def _largest_aligned_divisor(k, cap):
    """Largest d | k with d % 128 == 0 and d <= cap, or None."""
    d = (min(cap, k) // _LANE) * _LANE
    while d >= _LANE:
        if k % d == 0:
            return d
        d -= _LANE
    return None


# ----------------------------- kernels --------------------------------------


def _proj_kernel_direct(x_ref, m_ref, o_ref, *, resident_m, tk):
    """f32 output: accumulate straight into the resident output block."""
    k = pl.program_id(1)
    if resident_m:
        start = pl.multiple_of(k * tk, tk)
        m = m_ref[pl.ds(start, tk), :]
    else:
        m = m_ref[...]
    partial = jnp.dot(x_ref[...], m, preferred_element_type=jnp.float32)

    @pl.when(k == 0)
    def _():
        o_ref[...] = partial

    @pl.when(k != 0)
    def _():
        o_ref[...] = o_ref[...] + partial


def _proj_kernel_acc(x_ref, m_ref, o_ref, acc_ref, *, resident_m, tk):
    """Low-precision output: f32 scratch accumulator, cast once at the end."""
    k = pl.program_id(1)

    @pl.when(k == 0)
    def _():
        acc_ref[...] = jnp.zeros_like(acc_ref)

    if resident_m:
        start = pl.multiple_of(k * tk, tk)
        m = m_ref[pl.ds(start, tk), :]
    else:
        m = m_ref[...]
    acc_ref[...] += jnp.dot(x_ref[...], m, preferred_element_type=jnp.float32)

    @pl.when(k == pl.num_programs(1) - 1)
    def _():
        o_ref[...] = acc_ref[...].astype(o_ref.dtype)


# ----------------------------- wrapper ---------------------------------------


def build_projection(freqs, phases, channel_weights, image_size, n_channels,
                     dtype=jnp.float32):
    """Param-only precompute: M of shape (C*H*W, 2F). Hoist when params are static."""
    H, W = image_size
    C = n_channels
    F = freqs.shape[0]
    gx = jnp.linspace(0.0, 1.0, H, dtype=jnp.float32)
    gy = jnp.linspace(0.0, 1.0, W, dtype=jnp.float32)
    grid_x, grid_y = jnp.meshgrid(gx, gy, indexing="ij")            # (H, W)
    arg = (2.0 * jnp.pi * (grid_x[None] * freqs[:, 0, None, None]
                           + grid_y[None] * freqs[:, 1, None, None])
           + phases[:, None, None])                                 # (F, H, W)
    cos_b = jnp.cos(arg).reshape(F, H * W)
    sin_b = jnp.sin(arg).reshape(F, H * W)
    # Row order matches x.view(B, C, H, W): row = c*H*W + h*W + w
    m_cos = jnp.einsum("fc,fp->cpf", channel_weights, cos_b).reshape(C * H * W, F)
    m_sin = jnp.einsum("fc,fp->cpf", channel_weights, sin_b).reshape(C * H * W, F)
    return jnp.concatenate([m_cos, m_sin], axis=1).astype(dtype)    # (K, 2F)


def fourier_function_node_forward(x_flat, freqs, phases, channel_weights,
                                  image_size, n_channels, *, proj=None,
                                  tb_cap=512, x_tile_bytes=8 << 20,
                                  m_resident_bytes=8 << 20):
    """Mirrors FourierFunctionNode.forward: (B, C*H*W) -> (B, 2*n_features)."""
    H, W = image_size
    C = n_channels
    B, K = x_flat.shape
    assert K == C * H * W
    F = freqs.shape[0]
    NF = 2 * F

    if proj is None:
        # TODO(synk): for inference with static params, pass proj= precomputed
        # so this param-only work leaves the per-call hot path.
        proj = build_projection(freqs, phases, channel_weights, image_size, C,
                                x_flat.dtype)

    itemsize = jnp.dtype(x_flat.dtype).itemsize
    out_dtype = x_flat.dtype
    out_itemsize = jnp.dtype(out_dtype).itemsize

    # ---- batch tile: never pad/copy x along batch -------------------------
    if B <= 16:
        TB = B                                   # single full-extent block
    else:
        # >= 2 batch tiles so the "parallel" axis shards across v7x's 2 TCs.
        target = min(tb_cap, _round_up(pl.cdiv(B, 2), 8))
        TB = None
        d = (target // 8) * 8
        while d >= 8:                            # prefer an exact divisor of B
            if B % d == 0:
                TB = d
                break
            d -= 8
        if TB is None:
            TB = target                          # ragged last tile: OOB rows dropped
    n_btiles = pl.cdiv(B, TB)

    # ---- K tile: single contiguous tile if it fits, else aligned divisor ---
    tk_budget = max(_LANE, x_tile_bytes // (TB * itemsize))
    x_p, m_p, Kp = x_flat, proj, K
    if K <= tk_budget:
        TK = K                                   # one fully-contiguous x DMA per row tile
    else:
        TK = _largest_aligned_divisor(K, tk_budget)
        if TK is None:
            # Rare fallback (large K, not 128-aligned): zero-pad K (exact, 0*M==0).
            TK = (tk_budget // _LANE) * _LANE
            Kp = _round_up(K, TK)
            x_p = jnp.pad(x_flat, ((0, 0), (0, Kp - K)))
            m_p = jnp.pad(proj, ((0, Kp - K), (0, 0)))
    n_ktiles = Kp // TK

    # ---- projection matrix: fully VMEM-resident when small -----------------
    resident_m = (TK == Kp) or (Kp * NF * itemsize <= m_resident_bytes)
    if resident_m:
        m_spec = pl.BlockSpec((Kp, NF), lambda i, k: (0, 0))   # fetched once
    else:
        m_spec = pl.BlockSpec((TK, NF), lambda i, k: (k, 0))

    use_acc = out_dtype != jnp.float32
    if use_acc:
        kernel = functools.partial(_proj_kernel_acc, resident_m=resident_m, tk=TK)
        scratch = [pltpu.VMEM((TB, NF), jnp.float32)]
    else:
        kernel = functools.partial(_proj_kernel_direct, resident_m=resident_m, tk=TK)
        scratch = []

    # ---- VMEM sizing (valid for v5e/v6e 128 MiB and v7x 64 MiB) -------------
    vmem_need = (2 * TB * TK * itemsize                                  # x, dbl-buffered
                 + 2 * (Kp if resident_m else TK) * NF * itemsize        # M
                 + 2 * TB * NF * out_itemsize                            # output block
                 + (TB * NF * 4 if use_acc else 0))                      # acc scratch
    vmem_limit = int(min(max(2 * vmem_need + (2 << 20), 32 << 20), 48 << 20))

    out = pl.pallas_call(
        kernel,
        out_shape=jax.ShapeDtypeStruct((B, NF), out_dtype),
        grid_spec=pltpu.PrefetchScalarGridSpec(
            num_scalar_prefetch=0,
            grid=(n_btiles, n_ktiles),
            in_specs=[
                pl.BlockSpec((TB, TK), lambda i, k: (i, k)),
                m_spec,
            ],
            out_specs=pl.BlockSpec((TB, NF), lambda i, k: (i, 0)),
            scratch_shapes=scratch,
        ),
        compiler_params=pltpu.CompilerParams(
            dimension_semantics=("parallel", "arbitrary"),
            vmem_limit_bytes=vmem_limit),
    )(x_p, m_p)
    return out


# ----------------------------- reference & test ------------------------------


def _reference_forward(x_flat, freqs, phases, channel_weights, image_size,
                       n_channels):
    """Plain-JAX transcription of the PyTorch forward."""
    H, W = image_size
    C = n_channels
    B = x_flat.shape[0]
    x_img = x_flat.reshape(B, C, H, W)
    gx = jnp.linspace(0.0, 1.0, H, dtype=jnp.float32)
    gy = jnp.linspace(0.0, 1.0, W, dtype=jnp.float32)
    grid_x, grid_y = jnp.meshgrid(gx, gy, indexing="ij")
    arg = (2.0 * jnp.pi * (grid_x[None] * freqs[:, 0, None, None]
                           + grid_y[None] * freqs[:, 1, None, None])
           + phases[:, None, None])
    cos_b = jnp.cos(arg)
    sin_b = jnp.sin(arg)
    cwc = jnp.einsum("bchw,fhw->bfc", x_img, cos_b)
    swc = jnp.einsum("bchw,fhw->bfc", x_img, sin_b)
    cos_out = jnp.einsum("bfc,fc->bf", cwc, channel_weights)
    sin_out = jnp.einsum("bfc,fc->bf", swc, channel_weights)
    return jnp.concatenate([cos_out, sin_out], axis=1)


if __name__ == "__main__":
    C, H, W, F = 4, 16, 16, 4
    key = jax.random.PRNGKey(0)
    kx, kf, kp, kc, kx2 = jax.random.split(key, 5)
    freqs = jax.random.normal(kf, (F, 2), dtype=jnp.float32)
    phases = jax.random.normal(kp, (F,), dtype=jnp.float32)
    channel_weights = jax.random.normal(kc, (F, C), dtype=jnp.float32)

    fwd = jax.jit(functools.partial(
        fourier_function_node_forward, image_size=(H, W), n_channels=C))

    # Primary small case (batch=2), as implied by the module spec.
    B = 2
    x_flat = jax.random.normal(kx, (B, C * H * W), dtype=jnp.float32)
    out = fwd(x_flat, freqs, phases, channel_weights)
    jax.block_until_ready(out)
    ref = _reference_forward(x_flat, freqs, phases, channel_weights, (H, W), C)
    assert out.shape == (B, 2 * F), out.shape
    np.testing.assert_allclose(np.asarray(out), np.asarray(ref),
                               rtol=2e-4, atol=2e-4)

    # Secondary case exercising multiple batch tiles (megacore-friendly path).
    B2 = 24
    x_flat2 = jax.random.normal(kx2, (B2, C * H * W), dtype=jnp.float32)
    out2 = fwd(x_flat2, freqs, phases, channel_weights)
    jax.block_until_ready(out2)
    ref2 = _reference_forward(x_flat2, freqs, phases, channel_weights, (H, W), C)
    np.testing.assert_allclose(np.asarray(out2), np.asarray(ref2),
                               rtol=2e-4, atol=2e-4)

    print("KERNEL_OK")
</pallas_src>

<mosaic_0001>
module attributes {stable_mosaic.version = 11 : i64} {
  func.func @_proj_kernel_direct(%arg0: i32, %arg1: i32, %arg2: memref<2x1024xf32, #tpu.memory_space<vmem>>, %arg3: memref<1024x8xf32, #tpu.memory_space<vmem>>, %arg4: memref<2x8xf32, #tpu.memory_space<vmem>>) attributes {dimension_semantics = [#tpu.dimension_semantics<parallel>, #tpu.dimension_semantics<arbitrary>], iteration_bounds = array<i64: 1, 1>, scalar_prefetch = 0 : i64, scratch_operands = 0 : i64, tpu.core_type = #tpu.core_type<tc>, window_params = [{transform_indices = @transform_0, window_bounds = array<i64: 2, 1024>}, {pipeline_mode = #tpu.pipeline_mode<synchronous>, transform_indices = @transform_1, window_bounds = array<i64: 1024, 8>}, {transform_indices = @transform_2, window_bounds = array<i64: 2, 8>}]} {
    %c1024_i32 = arith.constant 1024 : i32
    %0 = arith.muli %arg1, %c1024_i32 : i32
    %1 = tpu.assume_multiple %0, 1024 : i32
    %2 = arith.index_cast %1 : i32 to index
    %c0 = arith.constant 0 : index
    %3 = vector.load %arg3[%2, %c0] : memref<1024x8xf32, #tpu.memory_space<vmem>>, vector<1024x8xf32>
    %c0_0 = arith.constant 0 : index
    %c0_1 = arith.constant 0 : index
    %4 = vector.load %arg2[%c0_0, %c0_1] : memref<2x1024xf32, #tpu.memory_space<vmem>>, vector<2x1024xf32>
    %cst = arith.constant dense<0.000000e+00> : vector<2x8xf32>
    %5 = tpu.matmul %4, %3, %cst {dimension_numbers = #tpu.dot_dimension_numbers<[1], [0], [0], [1], [0, 0, 1, 1], [], []>} : vector<2x1024xf32>, vector<1024x8xf32>, vector<2x8xf32> -> vector<2x8xf32>
    %c0_i32 = arith.constant 0 : i32
    %6 = arith.cmpi eq, %arg1, %c0_i32 : i32
    %7 = arith.extui %6 : i1 to i32
    %c0_i32_2 = arith.constant 0 : i32
    %8 = arith.cmpi ne, %7, %c0_i32_2 : i32
    scf.if %8 {
      %c0_5 = arith.constant 0 : index
      %c0_6 = arith.constant 0 : index
      %12 = vector.load %arg4[%c0_5, %c0_6] : memref<2x8xf32, #tpu.memory_space<vmem>>, vector<2x8xf32>
      tpu.vector_store %arg4[%c0_5, %c0_6], %5 {strides = array<i32>} : memref<2x8xf32, #tpu.memory_space<vmem>>, vector<2x8xf32>,
    } else {
    }
    %c0_i32_3 = arith.constant 0 : i32
    %9 = arith.cmpi ne, %arg1, %c0_i32_3 : i32
    %10 = arith.extui %9 : i1 to i32
    %c0_i32_4 = arith.constant 0 : i32
    %11 = arith.cmpi ne, %10, %c0_i32_4 : i32
    scf.if %11 {
      %c0_5 = arith.constant 0 : index
      %c0_6 = arith.constant 0 : index
      %12 = vector.load %arg4[%c0_5, %c0_6] : memref<2x8xf32, #tpu.memory_space<vmem>>, vector<2x8xf32>
      %13 = arith.addf %12, %5 : vector<2x8xf32>
      %c0_7 = arith.constant 0 : index
      %c0_8 = arith.constant 0 : index
      %14 = vector.load %arg4[%c0_7, %c0_8] : memref<2x8xf32, #tpu.memory_space<vmem>>, vector<2x8xf32>
      tpu.vector_store %arg4[%c0_7, %c0_8], %13 {strides = array<i32>} : memref<2x8xf32, #tpu.memory_space<vmem>>, vector<2x8xf32>,
    } else {
    }
    return
  }
  func.func @transform_0(%arg0: i32, %arg1: i32) -> (i32, i32) {
    %c0_i32 = arith.constant 0 : i32
    return %arg0, %arg1 : i32, i32
  }
  func.func @transform_1(%arg0: i32, %arg1: i32) -> (i32, i32) {
    %c0_i32 = arith.constant 0 : i32
    %c0_i32_0 = arith.constant 0 : i32
    %c0_i32_1 = arith.constant 0 : i32
    return %c0_i32, %c0_i32_0 : i32, i32
  }
  func.func @transform_2(%arg0: i32, %arg1: i32) -> (i32, i32) {
    %c0_i32 = arith.constant 0 : i32
    %c0_i32_0 = arith.constant 0 : i32
    return %arg0, %c0_i32 : i32, i32
  }
}

</mosaic_0001>

<llo_original>
// kernel: fourier_function_node_forward.1
$region0: #{fourier_function_node_forward.1}
  #allocation0 [shape = 'u32[]', space=smem, size = 0x4, offset = 0x4, fixed_abs, tag = 'smem constant byte address 0x4 - core index']
  #allocation1 [shape = 'u32[144,128]{1,0:T(1,128)}', space=vmem, size = 0x12000, scoped, tag = 'internal scratch']
  %s0 = inlined_call_operand.vmem [shape: f32[2,1024], index: 0, kind: input, shape index: {}]
  %s1 = inlined_call_operand.vmem [shape: f32[1024,8], index: 1, kind: input, shape index: {}]
  %s2 = inlined_call_operand.hbm [shape: f32[2,8], index: 2, kind: output, shape index: {}]
  %s3 = sld [smem:[#allocation0]]
  $region26: #{fourier_function_node_forward.1} parent=0
    _
  %s5 = ssub.s32 1, %s3
  %s6 = scalar_select 0, %s5, %s3
  $region1: #{fourier_function_node_forward.1} parent=0
    #allocation2 [shape = 'u8[1024]{0}', space=vmem, size = 0x400, scoped, tag = 'output window, operand 0, single buffered']
    #allocation3 [shape = 's32[1]{0}', space=sflag, size = 0x4, scoped, tag = 'scoped memory for fourier_function_node_forward.1']
    %7 = vsyncpa [#allocation3], 0
    // Predicated region
    $region2: #{fourier_function_node_forward.1} parent=1 // pred_check
      _
    $region3: #{fourier_function_node_forward.1} parent=1 // pred_check_branch
      %9 = sbr.rel (0) target = $region5
    $region4: #{fourier_function_node_forward.1} parent=1 // pred_region
      _
    $region5: #{fourier_function_node_forward.1} parent=1 // pred_fallthru
      _
    // Predicated region
    $region6: #{fourier_function_node_forward.1} parent=1 // pred_check
      _
    $region7: #{fourier_function_node_forward.1} parent=1 // pred_check_branch
      %11 = sbr.rel (0) target = $region9
    $region8: #{fourier_function_node_forward.1} parent=1 // pred_region
      _
    $region9: #{fourier_function_node_forward.1} parent=1 // pred_fallthru
      _
    %s12 = smul.u32 0, 1024
    %s13 = scalar_lea.vmem %s1, %s12
    %v14 = vld [vmem:[%s13] sm:$0xff]
    %v15 = vld [vmem:[%s13 + $0x8] sm:$0xff]
    %v16 = vld [vmem:[%s13 + $0x10] sm:$0xff]
    %v17 = vld [vmem:[%s13 + $0x18] sm:$0xff]
    %v18 = vld [vmem:[%s13 + $0x20] sm:$0xff]
    %v19 = vld [vmem:[%s13 + $0x28] sm:$0xff]
    %v20 = vld [vmem:[%s13 + $0x30] sm:$0xff]
    %v21 = vld [vmem:[%s13 + $0x38] sm:$0xff]
    %v22 = vld [vmem:[%s13 + $0x40] sm:$0xff]
    %v23 = vld [vmem:[%s13 + $0x48] sm:$0xff]
    %v24 = vld [vmem:[%s13 + $0x50] sm:$0xff]
    %v25 = vld [vmem:[%s13 + $0x58] sm:$0xff]
    %v26 = vld [vmem:[%s13 + $0x60] sm:$0xff]
    %v27 = vld [vmem:[%s13 + $0x68] sm:$0xff]
    %v28 = vld [vmem:[%s13 + $0x70] sm:$0xff]
    %v29 = vld [vmem:[%s13 + $0x78] sm:$0xff]
    %v30 = vld [vmem:[%s13 + $0x80] sm:$0xff]
    %v31 = vld [vmem:[%s13 + $0x88] sm:$0xff]
    %v32 = vld [vmem:[%s13 + $0x90] sm:$0xff]
    %v33 = vld [vmem:[%s13 + $0x98] sm:$0xff]
    %v34 = vld [vmem:[%s13 + $0xa0] sm:$0xff]
    %v35 = vld [vmem:[%s13 + $0xa8] sm:$0xff]
    %v36 = vld [vmem:[%s13 + $0xb0] sm:$0xff]
    %v37 = vld [vmem:[%s13 + $0xb8] sm:$0xff]
    %v38 = vld [vmem:[%s13 + $0xc0] sm:$0xff]
    %v39 = vld [vmem:[%s13 + $0xc8] sm:$0xff]
    %v40 = vld [vmem:[%s13 + $0xd0] sm:$0xff]
    %v41 = vld [vmem:[%s13 + $0xd8] sm:$0xff]
    %v42 = vld [vmem:[%s13 + $0xe0] sm:$0xff]
    %v43 = vld [vmem:[%s13 + $0xe8] sm:$0xff]
    %v44 = vld [vmem:[%s13 + $0xf0] sm:$0xff]
    %v45 = vld [vmem:[%s13 + $0xf8] sm:$0xff]
    %v46 = vld [vmem:[%s13 + $0x100] sm:$0xff]
    %v47 = vld [vmem:[%s13 + $0x108] sm:$0xff]
    %v48 = vld [vmem:[%s13 + $0x110] sm:$0xff]
    %v49 = vld [vmem:[%s13 + $0x118] sm:$0xff]
    %v50 = vld [vmem:[%s13 + $0x120] sm:$0xff]
    %v51 = vld [vmem:[%s13 + $0x128] sm:$0xff]
    %v52 = vld [vmem:[%s13 + $0x130] sm:$0xff]
    %v53 = vld [vmem:[%s13 + $0x138] sm:$0xff]
    %v54 = vld [vmem:[%s13 + $0x140] sm:$0xff]
    %v55 = vld [vmem:[%s13 + $0x148] sm:$0xff]
    %v56 = vld [vmem:[%s13 + $0x150] sm:$0xff]
    %v57 = vld [vmem:[%s13 + $0x158] sm:$0xff]
    %v58 = vld [vmem:[%s13 + $0x160] sm:$0xff]
    %v59 = vld [vmem:[%s13 + $0x168] sm:$0xff]
    %v60 = vld [vmem:[%s13 + $0x170] sm:$0xff]
    %v61 = vld [vmem:[%s13 + $0x178] sm:$0xff]
    %v62 = vld [vmem:[%s13 + $0x180] sm:$0xff]
    %v63 = vld [vmem:[%s13 + $0x188] sm:$0xff]
    %v64 = vld [vmem:[%s13 + $0x190] sm:$0xff]
    %v65 = vld [vmem:[%s13 + $0x198] sm:$0xff]
    %v66 = vld [vmem:[%s13 + $0x1a0] sm:$0xff]
    %v67 = vld [vmem:[%s13 + $0x1a8] sm:$0xff]
    %v68 = vld [vmem:[%s13 + $0x1b0] sm:$0xff]
    %v69 = vld [vmem:[%s13 + $0x1b8] sm:$0xff]
    %v70 = vld [vmem:[%s13 + $0x1c0] sm:$0xff]
    %v71 = vld [vmem:[%s13 + $0x1c8] sm:$0xff]
    %v72 = vld [vmem:[%s13 + $0x1d0] sm:$0xff]
    %v73 = vld [vmem:[%s13 + $0x1d8] sm:$0xff]
    %v74 = vld [vmem:[%s13 + $0x1e0] sm:$0xff]
    %v75 = vld [vmem:[%s13 + $0x1e8] sm:$0xff]
    %v76 = vld [vmem:[%s13 + $0x1f0] sm:$0xff]
    %v77 = vld [vmem:[%s13 + $0x1f8] sm:$0xff]
    %v78 = vld [vmem:[%s13 + $0x200] sm:$0xff]
    %v79 = vld [vmem:[%s13 + $0x208] sm:$0xff]
    %v80 = vld [vmem:[%s13 + $0x210] sm:$0xff]
    %v81 = vld [vmem:[%s13 + $0x218] sm:$0xff]
    %v82 = vld [vmem:[%s13 + $0x220] sm:$0xff]
    %v83 = vld [vmem:[%s13 + $0x228] sm:$0xff]
    %v84 = vld [vmem:[%s13 + $0x230] sm:$0xff]
    %v85 = vld [vmem:[%s13 + $0x238] sm:$0xff]
    %v86 = vld [vmem:[%s13 + $0x240] sm:$0xff]
    %v87 = vld [vmem:[%s13 + $0x248] sm:$0xff]
    %v88 = vld [vmem:[%s13 + $0x250] sm:$0xff]
    %v89 = vld [vmem:[%s13 + $0x258] sm:$0xff]
    %v90 = vld [vmem:[%s13 + $0x260] sm:$0xff]
    %v91 = vld [vmem:[%s13 + $0x268] sm:$0xff]
    %v92 = vld [vmem:[%s13 + $0x270] sm:$0xff]
    %v93 = vld [vmem:[%s13 + $0x278] sm:$0xff]
    %v94 = vld [vmem:[%s13 + $0x280] sm:$0xff]
    %v95 = vld [vmem:[%s13 + $0x288] sm:$0xff]
    %v96 = vld [vmem:[%s13 + $0x290] sm:$0xff]
    %v97 = vld [vmem:[%s13 + $0x298] sm:$0xff]
    %v98 = vld [vmem:[%s13 + $0x2a0] sm:$0xff]
    %v99 = vld [vmem:[%s13 + $0x2a8] sm:$0xff]
    %v100 = vld [vmem:[%s13 + $0x2b0] sm:$0xff]
    %v101 = vld [vmem:[%s13 + $0x2b8] sm:$0xff]
    %v102 = vld [vmem:[%s13 + $0x2c0] sm:$0xff]
    %v103 = vld [vmem:[%s13 + $0x2c8] sm:$0xff]
    %v104 = vld [vmem:[%s13 + $0x2d0] sm:$0xff]
    %v105 = vld [vmem:[%s13 + $0x2d8] sm:$0xff]
    %v106 = vld [vmem:[%s13 + $0x2e0] sm:$0xff]
    %v107 = vld [vmem:[%s13 + $0x2e8] sm:$0xff]
    %v108 = vld [vmem:[%s13 + $0x2f0] sm:$0xff]
    %v109 = vld [vmem:[%s13 + $0x2f8] sm:$0xff]
    %v110 = vld [vmem:[%s13 + $0x300] sm:$0xff]
    %v111 = vld [vmem:[%s13 + $0x308] sm:$0xff]
    %v112 = vld [vmem:[%s13 + $0x310] sm:$0xff]
    %v113 = vld [vmem:[%s13 + $0x318] sm:$0xff]
    %v114 = vld [vmem:[%s13 + $0x320] sm:$0xff]
    %v115 = vld [vmem:[%s13 + $0x328] sm:$0xff]
    %v116 = vld [vmem:[%s13 + $0x330] sm:$0xff]
    %v117 = vld [vmem:[%s13 + $0x338] sm:$0xff]
    %v118 = vld [vmem:[%s13 + $0x340] sm:$0xff]
    %v119 = vld [vmem:[%s13 + $0x348] sm:$0xff]
    %v120 = vld [vmem:[%s13 + $0x350] sm:$0xff]
    %v121 = vld [vmem:[%s13 + $0x358] sm:$0xff]
    %v122 = vld [vmem:[%s13 + $0x360] sm:$0xff]
    %v123 = vld [vmem:[%s13 + $0x368] sm:$0xff]
    %v124 = vld [vmem:[%s13 + $0x370] sm:$0xff]
    %v125 = vld [vmem:[%s13 + $0x378] sm:$0xff]
    %v126 = vld [vmem:[%s13 + $0x380] sm:$0xff]
    %v127 = vld [vmem:[%s13 + $0x388] sm:$0xff]
    %v128 = vld [vmem:[%s13 + $0x390] sm:$0xff]
    %v129 = vld [vmem:[%s13 + $0x398] sm:$0xff]
    %v130 = vld [vmem:[%s13 + $0x3a0] sm:$0xff]
    %v131 = vld [vmem:[%s13 + $0x3a8] sm:$0xff]
    %v132 = vld [vmem:[%s13 + $0x3b0] sm:$0xff]
    %v133 = vld [vmem:[%s13 + $0x3b8] sm:$0xff]
    %v134 = vld [vmem:[%s13 + $0x3c0] sm:$0xff]
    %v135 = vld [vmem:[%s13 + $0x3c8] sm:$0xff]
    %v136 = vld [vmem:[%s13 + $0x3d0] sm:$0xff]
    %v137 = vld [vmem:[%s13 + $0x3d8] sm:$0xff]
    %v138 = vld [vmem:[%s13 + $0x3e0] sm:$0xff]
    %v139 = vld [vmem:[%s13 + $0x3e8] sm:$0xff]
    %v140 = vld [vmem:[%s13 + $0x3f0] sm:$0xff]
    %v141 = vld [vmem:[%s13 + $0x3f8] sm:$0xff]
    %v142 = vld [vmem:[%s0] sm:$0xff]
    %v143 = vld [vmem:[%s0 + $0x8] sm:$0xff]
    %v146 = vcombine.high %v142, %v142
    %v148 = vunpack.c.l.s4 1983009808
    %v149 = vunpack.c.0.s8 %v148
    %v150 = vlaneseq
    %v151 = vshrl.u32 %v150, 7
    %v152 = vsub.s32 %v149, %v151
    %v153 = vrot.slane %v142, %v152
    %v155 = vunpack.c.l.s4 1983009808
    %v156 = vunpack.c.0.s8 %v155
    %v157 = vlaneseq
    %v158 = vshrl.u32 %v157, 7
    %v159 = vsub.s32 %v156, %v158
    %v160 = vrot.slane %v146, %v159
    %v161 = vcombine.high %v153, %v153
    %v162 = vcombine.high %v160, %v160
    %v163 = vcombine.high %v143, %v143
    %v165 = vunpack.c.l.s4 1983009808
    %v166 = vunpack.c.0.s8 %v165
    %v167 = vlaneseq
    %v168 = vshrl.u32 %v167, 7
    %v169 = vsub.s32 %v166, %v168
    %v170 = vrot.slane %v143, %v169
    %v172 = vunpack.c.l.s4 1983009808
    %v173 = vunpack.c.0.s8 %v172
    %v174 = vlaneseq
    %v175 = vshrl.u32 %v174, 7
    %v176 = vsub.s32 %v173, %v175
    %v177 = vrot.slane %v163, %v176
    %v178 = vcombine.high %v170, %v170
    %v179 = vcombine.high %v177, %v177
    %188 = vmatprep.subr.mxu0 0.0
    %189 = vmatpush1.msra.mxu0 %v29
    %190 = vmatprep.subr.mxu0 0.0
    %191 = vmatpush1.msra.mxu0 %v28
    %192 = vmatprep.subr.mxu0 0.0
    %193 = vmatpush1.msra.mxu0 %v27
    %194 = vmatprep.subr.mxu0 0.0
    %195 = vmatpush1.msra.mxu0 %v26
    %196 = vmatprep.subr.mxu0 0.0
    %197 = vmatpush1.msra.mxu0 %v25
    %198 = vmatprep.subr.mxu0 0.0
    %199 = vmatpush1.msra.mxu0 %v24
    %200 = vmatprep.subr.mxu0 0.0
    %201 = vmatpush1.msra.mxu0 %v23
    %202 = vmatprep.subr.mxu0 0.0
    %203 = vmatpush1.msra.mxu0 %v22
    %204 = vmatprep.subr.mxu0 0.0
    %205 = vmatpush1.msra.mxu0 %v21
    %206 = vmatprep.subr.mxu0 0.0
    %207 = vmatpush1.msra.mxu0 %v20
    %208 = vmatprep.subr.mxu0 0.0
    %209 = vmatpush1.msra.mxu0 %v19
    %210 = vmatprep.subr.mxu0 0.0
    %211 = vmatpush1.msra.mxu0 %v18
    %212 = vmatprep.subr.mxu0 0.0
    %213 = vmatpush1.msra.mxu0 %v17
    %214 = vmatprep.subr.mxu0 0.0
    %215 = vmatpush1.msra.mxu0 %v16
    %216 = vmatprep.subr.mxu0 0.0
    %217 = vmatpush1.msra.mxu0 %v15
    %218 = vmatprep.subr.mxu0 0.0
    %219 = vmatpush1.msra.mxu0 %v14
    %220 = vmatprep.subr.mxu0 0.0
    %221 = vmatpush2.msra.mxu0 %v45
    %222 = vmatprep.subr.mxu0 0.0
    %223 = vmatpush2.msra.mxu0 %v44
    %224 = vmatprep.subr.mxu0 0.0
    %225 = vmatpush2.msra.mxu0 %v43
    %226 = vmatprep.subr.mxu0 0.0
    %227 = vmatpush2.msra.mxu0 %v42
    %228 = vmatprep.subr.mxu0 0.0
    %229 = vmatpush2.msra.mxu0 %v41
    %230 = vmatprep.subr.mxu0 0.0
    %231 = vmatpush2.msra.mxu0 %v40
    %232 = vmatprep.subr.mxu0 0.0
    %233 = vmatpush2.msra.mxu0 %v39
    %234 = vmatprep.subr.mxu0 0.0
    %235 = vmatpush2.msra.mxu0 %v38
    %236 = vmatprep.subr.mxu0 0.0
    %237 = vmatpush2.msra.mxu0 %v37
    %238 = vmatprep.subr.mxu0 0.0
    %239 = vmatpush2.msra.mxu0 %v36
    %240 = vmatprep.subr.mxu0 0.0
    %241 = vmatpush2.msra.mxu0 %v35
    %242 = vmatprep.subr.mxu0 0.0
    %243 = vmatpush2.msra.mxu0 %v34
    %244 = vmatprep.subr.mxu0 0.0
    %245 = vmatpush2.msra.mxu0 %v33
    %246 = vmatprep.subr.mxu0 0.0
    %247 = vmatpush2.msra.mxu0 %v32
    %248 = vmatprep.subr.mxu0 0.0
    %249 = vmatpush2.msra.mxu0 %v31
    %250 = vmatprep.subr.mxu0 0.0
    %251 = vmatpush2.msra.mxu0 %v30
    %252 = vmatprep.mubr.f32.mxu0 %v161
    %253 = vmatmul.mubr.f32.gmra.mxu0 %v153
    %v254 = vpop.f32.mrf.mxu0
    %v255 = vadd.f32 0.0, %v254
    %v256 = vpop.f32.mrf.mxu0
    %257 = vdwg.mxu0
    %258 = vmatprep.subr.mxu0 0.0
    %259 = vmatpush1.msra.mxu0 %v61
    %260 = vmatprep.subr.mxu0 0.0
    %261 = vmatpush1.msra.mxu0 %v60
    %262 = vmatprep.subr.mxu0 0.0
    %263 = vmatpush1.msra.mxu0 %v59
    %264 = vmatprep.subr.mxu0 0.0
    %265 = vmatpush1.msra.mxu0 %v58
    %266 = vmatprep.subr.mxu0 0.0
    %267 = vmatpush1.msra.mxu0 %v57
    %268 = vmatprep.subr.mxu0 0.0
    %269 = vmatpush1.msra.mxu0 %v56
    %270 = vmatprep.subr.mxu0 0.0
    %271 = vmatpush1.msra.mxu0 %v55
    %272 = vmatprep.subr.mxu0 0.0
    %273 = vmatpush1.msra.mxu0 %v54
    %274 = vmatprep.subr.mxu0 0.0
    %275 = vmatpush1.msra.mxu0 %v53
    %276 = vmatprep.subr.mxu0 0.0
    %277 = vmatpush1.msra.mxu0 %v52
    %278 = vmatprep.subr.mxu0 0.0
    %279 = vmatpush1.msra.mxu0 %v51
    %280 = vmatprep.subr.mxu0 0.0
    %281 = vmatpush1.msra.mxu0 %v50
    %282 = vmatprep.subr.mxu0 0.0
    %283 = vmatpush1.msra.mxu0 %v49
    %284 = vmatprep.subr.mxu0 0.0
    %285 = vmatpush1.msra.mxu0 %v48
    %286 = vmatprep.subr.mxu0 0.0
    %287 = vmatpush1.msra.mxu0 %v47
    %288 = vmatprep.subr.mxu0 0.0
    %289 = vmatpush1.msra.mxu0 %v46
    %290 = vmatprep.subr.mxu0 0.0
    %291 = vmatpush2.msra.mxu0 %v77
    %292 = vmatprep.subr.mxu0 0.0
    %293 = vmatpush2.msra.mxu0 %v76
    %294 = vmatprep.subr.mxu0 0.0
    %295 = vmatpush2.msra.mxu0 %v75
    %296 = vmatprep.subr.mxu0 0.0
    %297 = vmatpush2.msra.mxu0 %v74
    %298 = vmatprep.subr.mxu0 0.0
    %299 = vmatpush2.msra.mxu0 %v73
    %300 = vmatprep.subr.mxu0 0.0
    %301 = vmatpush2.msra.mxu0 %v72
    %302 = vmatprep.subr.mxu0 0.0
    %303 = vmatpush2.msra.mxu0 %v71
    %304 = vmatprep.subr.mxu0 0.0
    %305 = vmatpush2.msra.mxu0 %v70
    %306 = vmatprep.subr.mxu0 0.0
    %307 = vmatpush2.msra.mxu0 %v69
    %308 = vmatprep.subr.mxu0 0.0
    %309 = vmatpush2.msra.mxu0 %v68
    %310 = vmatprep.subr.mxu0 0.0
    %311 = vmatpush2.msra.mxu0 %v67
    %312 = vmatprep.subr.mxu0 0.0
    %313 = vmatpush2.msra.mxu0 %v66
    %314 = vmatprep.subr.mxu0 0.0
    %315 = vmatpush2.msra.mxu0 %v65
    %316 = vmatprep.subr.mxu0 0.0
    %317 = vmatpush2.msra.mxu0 %v64
    %318 = vmatprep.subr.mxu0 0.0
    %319 = vmatpush2.msra.mxu0 %v63
    %320 = vmatprep.subr.mxu0 0.0
    %321 = vmatpush2.msra.mxu0 %v62
    %322 = vmatprep.mubr.f32.mxu0 %v162
    %323 = vmatmul.mubr.f32.gmra.mxu0 %v160
    %v324 = vpop.f32.mrf.mxu0
    %v325 = vadd.f32 %v255, %v324
    %v326 = vpop.f32.mrf.mxu0
    %327 = vdwg.mxu0
    %328 = vmatprep.subr.mxu0 0.0
    %329 = vmatpush1.msra.mxu0 %v93
    %330 = vmatprep.subr.mxu0 0.0
    %331 = vmatpush1.msra.mxu0 %v92
    %332 = vmatprep.subr.mxu0 0.0
    %333 = vmatpush1.msra.mxu0 %v91
    %334 = vmatprep.subr.mxu0 0.0
    %335 = vmatpush1.msra.mxu0 %v90
    %336 = vmatprep.subr.mxu0 0.0
    %337 = vmatpush1.msra.mxu0 %v89
    %338 = vmatprep.subr.mxu0 0.0
    %339 = vmatpush1.msra.mxu0 %v88
    %340 = vmatprep.subr.mxu0 0.0
    %341 = vmatpush1.msra.mxu0 %v87
    %342 = vmatprep.subr.mxu0 0.0
    %343 = vmatpush1.msra.mxu0 %v86
    %344 = vmatprep.subr.mxu0 0.0
    %345 = vmatpush1.msra.mxu0 %v85
    %346 = vmatprep.subr.mxu0 0.0
    %347 = vmatpush1.msra.mxu0 %v84
    %348 = vmatprep.subr.mxu0 0.0
    %349 = vmatpush1.msra.mxu0 %v83
    %350 = vmatprep.subr.mxu0 0.0
    %351 = vmatpush1.msra.mxu0 %v82
    %352 = vmatprep.subr.mxu0 0.0
    %353 = vmatpush1.msra.mxu0 %v81
    %354 = vmatprep.subr.mxu0 0.0
    %355 = vmatpush1.msra.mxu0 %v80
    %356 = vmatprep.subr.mxu0 0.0
    %357 = vmatpush1.msra.mxu0 %v79
    %358 = vmatprep.subr.mxu0 0.0
    %359 = vmatpush1.msra.mxu0 %v78
    %360 = vmatprep.subr.mxu0 0.0
    %361 = vmatpush2.msra.mxu0 %v109
    %362 = vmatprep.subr.mxu0 0.0
    %363 = vmatpush2.msra.mxu0 %v108
    %364 = vmatprep.subr.mxu0 0.0
    %365 = vmatpush2.msra.mxu0 %v107
    %366 = vmatprep.subr.mxu0 0.0
    %367 = vmatpush2.msra.mxu0 %v106
    %368 = vmatprep.subr.mxu0 0.0
    %369 = vmatpush2.msra.mxu0 %v105
    %370 = vmatprep.subr.mxu0 0.0
    %371 = vmatpush2.msra.mxu0 %v104
    %372 = vmatprep.subr.mxu0 0.0
    %373 = vmatpush2.msra.mxu0 %v103
    %374 = vmatprep.subr.mxu0 0.0
    %375 = vmatpush2.msra.mxu0 %v102
    %376 = vmatprep.subr.mxu0 0.0
    %377 = vmatpush2.msra.mxu0 %v101
    %378 = vmatprep.subr.mxu0 0.0
    %379 = vmatpush2.msra.mxu0 %v100
    %380 = vmatprep.subr.mxu0 0.0
    %381 = vmatpush2.msra.mxu0 %v99
    %382 = vmatprep.subr.mxu0 0.0
    %383 = vmatpush2.msra.mxu0 %v98
    %384 = vmatprep.subr.mxu0 0.0
    %385 = vmatpush2.msra.mxu0 %v97
    %386 = vmatprep.subr.mxu0 0.0
    %387 = vmatpush2.msra.mxu0 %v96
    %388 = vmatprep.subr.mxu0 0.0
    %389 = vmatpush2.msra.mxu0 %v95
    %390 = vmatprep.subr.mxu0 0.0
    %391 = vmatpush2.msra.mxu0 %v94
    %392 = vmatprep.mubr.f32.mxu0 %v178
    %393 = vmatmul.mubr.f32.gmra.mxu0 %v170
    %v394 = vpop.f32.mrf.mxu0
    %v395 = vadd.f32 %v325, %v394
    %v396 = vpop.f32.mrf.mxu0
    %397 = vdwg.mxu0
    %398 = vmatprep.subr.mxu0 0.0
    %399 = vmatpush1.msra.mxu0 %v125
    %400 = vmatprep.subr.mxu0 0.0
    %401 = vmatpush1.msra.mxu0 %v124
    %402 = vmatprep.subr.mxu0 0.0
    %403 = vmatpush1.msra.mxu0 %v123
    %404 = vmatprep.subr.mxu0 0.0
    %405 = vmatpush1.msra.mxu0 %v122
    %406 = vmatprep.subr.mxu0 0.0
    %407 = vmatpush1.msra.mxu0 %v121
    %408 = vmatprep.subr.mxu0 0.0
    %409 = vmatpush1.msra.mxu0 %v120
    %410 = vmatprep.subr.mxu0 0.0
    %411 = vmatpush1.msra.mxu0 %v119
    %412 = vmatprep.subr.mxu0 0.0
    %413 = vmatpush1.msra.mxu0 %v118
    %414 = vmatprep.subr.mxu0 0.0
    %415 = vmatpush1.msra.mxu0 %v117
    %416 = vmatprep.subr.mxu0 0.0
    %417 = vmatpush1.msra.mxu0 %v116
    %418 = vmatprep.subr.mxu0 0.0
    %419 = vmatpush1.msra.mxu0 %v115
    %420 = vmatprep.subr.mxu0 0.0
    %421 = vmatpush1.msra.mxu0 %v114
    %422 = vmatprep.subr.mxu0 0.0
    %423 = vmatpush1.msra.mxu0 %v113
    %424 = vmatprep.subr.mxu0 0.0
    %425 = vmatpush1.msra.mxu0 %v112
    %426 = vmatprep.subr.mxu0 0.0
    %427 = vmatpush1.msra.mxu0 %v111
    %428 = vmatprep.subr.mxu0 0.0
    %429 = vmatpush1.msra.mxu0 %v110
    %430 = vmatprep.subr.mxu0 0.0
    %431 = vmatpush2.msra.mxu0 %v141
    %432 = vmatprep.subr.mxu0 0.0
    %433 = vmatpush2.msra.mxu0 %v140
    %434 = vmatprep.subr.mxu0 0.0
    %435 = vmatpush2.msra.mxu0 %v139
    %436 = vmatprep.subr.mxu0 0.0
    %437 = vmatpush2.msra.mxu0 %v138
    %438 = vmatprep.subr.mxu0 0.0
    %439 = vmatpush2.msra.mxu0 %v137
    %440 = vmatprep.subr.mxu0 0.0
    %441 = vmatpush2.msra.mxu0 %v136
    %442 = vmatprep.subr.mxu0 0.0
    %443 = vmatpush2.msra.mxu0 %v135
    %444 = vmatprep.subr.mxu0 0.0
    %445 = vmatpush2.msra.mxu0 %v134
    %446 = vmatprep.subr.mxu0 0.0
    %447 = vmatpush2.msra.mxu0 %v133
    %448 = vmatprep.subr.mxu0 0.0
    %449 = vmatpush2.msra.mxu0 %v132
    %450 = vmatprep.subr.mxu0 0.0
    %451 = vmatpush2.msra.mxu0 %v131
    %452 = vmatprep.subr.mxu0 0.0
    %453 = vmatpush2.msra.mxu0 %v130
    %454 = vmatprep.subr.mxu0 0.0
    %455 = vmatpush2.msra.mxu0 %v129
    %456 = vmatprep.subr.mxu0 0.0
    %457 = vmatpush2.msra.mxu0 %v128
    %458 = vmatprep.subr.mxu0 0.0
    %459 = vmatpush2.msra.mxu0 %v127
    %460 = vmatprep.subr.mxu0 0.0
    %461 = vmatpush2.msra.mxu0 %v126
    %462 = vmatprep.mubr.f32.mxu0 %v179
    %463 = vmatmul.mubr.f32.gmra.mxu0 %v177
    %v464 = vpop.f32.mrf.mxu0
    %v465 = vadd.f32 %v395, %v464
    %v466 = vpop.f32.mrf.mxu0
    %467 = vdwg.mxu0
    %p468 = scmp.eq.s32.totalorder 0, 0
    // Predicated region
    $region10: #{fourier_function_node_forward.1} parent=1 // pred_check
      %p469 = pneg %p468
    $region11: #{fourier_function_node_forward.1} parent=1 // pred_check_branch
      %471 = sbr.rel (%p469) target = $region13
    $region12: #{fourier_function_node_forward.1} parent=1 // pred_region
      %vm472 = vcmask 58368
      %473 = vst.msk [vmem:[#allocation2] sm:$0x3] %vm472, %v465
    $region13: #{fourier_function_node_forward.1} parent=1 // pred_fallthru
      _
    %p474 = scmp.ne.s32.totalorder 0, 0
    // Predicated region
    $region14: #{fourier_function_node_forward.1} parent=1 // pred_check
      %p475 = pneg %p474
    $region15: #{fourier_function_node_forward.1} parent=1 // pred_check_branch
      %477 = sbr.rel (%p475) target = $region17
    $region16: #{fourier_function_node_forward.1} parent=1 // pred_region
      %v478 = vld [vmem:[#allocation2] sm:$0x3]
      %v479 = vadd.f32 %v478, %v465
      %vm480 = vcmask 58368
      %481 = vst.msk [vmem:[#allocation2] sm:$0x3] %vm480, %v479
    $region17: #{fourier_function_node_forward.1} parent=1 // pred_fallthru
      _
    // Predicated region
    $region18: #{fourier_function_node_forward.1} parent=1 // pred_check
      _
    $region19: #{fourier_function_node_forward.1} parent=1 // pred_check_branch
      %483 = sbr.rel (0) target = $region21
    $region20: #{fourier_function_node_forward.1} parent=1 // pred_region
      %s485 = ssub.s32 32, 32
      %486 = vsyncadd [#allocation3], %s485
      %s488 = sshll.u32 [#allocation2], 4
      %s489 = int_to_ptr.vmem [resolvable:$true] %s488
      %491 = dma.vmem_to_hbm [thread:$0]  %s489, 32, %s2, [#allocation3]
    $region21: #{fourier_function_node_forward.1} parent=1 // pred_fallthru
      _
    // Predicated region
    $region22: #{fourier_function_node_forward.1} parent=1 // pred_check
      _
    $region23: #{fourier_function_node_forward.1} parent=1 // pred_check_branch
      %493 = sbr.rel (0) target = $region25
    $region24: #{fourier_function_node_forward.1} parent=1 // pred_region
      %494 = dma.done [#allocation3], 32
    $region25: #{fourier_function_node_forward.1} parent=1 // pred_fallthru
      _
    %495 = vsyncpa [#allocation3], 1

</llo_original>
